<compile_context>
chip_gen: v6e
topology: v6e:2x2x1
jax: 0.10.0
libtpu: 0.0.40
codegen_flags: <defaults>
</compile_context>

<pallas_src>
import functools

import jax
import jax.numpy as jnp
from jax.experimental import pallas as pl
from jax.experimental.pallas import tpu as pltpu

_LANE = 128


def _round_up(x, m):
    return ((x + m - 1) // m) * m


# --------------------------------------------------------------------------------------
# Path A: whole sample resident in VMEM — one HBM read + one HBM write per element.
# --------------------------------------------------------------------------------------
def _se_resident_kernel(x_ref, w1t_ref, b1_ref, w2_ref, b2_ref, o_ref, *, inv_hw):
    x = x_ref[0]                                                       # (C, HW), x dtype

    # AdaptiveAvgPool2d(1): lane-axis reduction, accumulate in f32, scale by 1/HW.
    pooled = jnp.sum(x.astype(jnp.float32), axis=-1, keepdims=True) * inv_hw   # (C, 1)

    # Conv2d(C->R, 1x1) + bias as VPU multiply + sublane reduce (avoid 1-wide MXU matvec).
    h = jnp.sum(w1t_ref[...] * pooled, axis=0, keepdims=True) + b1_ref[...]    # (1, R)
    h = h * jax.nn.sigmoid(h)                                                  # SiLU
    # Conv2d(R->C, 1x1) + bias as VPU multiply + lane reduce, then Sigmoid.
    g = jnp.sum(w2_ref[...] * h, axis=-1, keepdims=True) + b2_ref[...]         # (C, 1)
    gate = jax.nn.sigmoid(g)                                                   # (C, 1)

    # x * se(x): per-channel gate broadcast over spatial lanes, multiply in x's dtype.
    o_ref[0] = x * gate.astype(x.dtype)


# --------------------------------------------------------------------------------------
# Path B (fallback for activations too big for VMEM): two sweeps over spatial tiles.
#   Sweep 1: accumulate pooled sum per (n, c), emit the gate.
#   Sweep 2: re-read x tiles and apply the gate (both grid axes parallel).
# --------------------------------------------------------------------------------------
def _se_gate_kernel(x_ref, w1t_ref, b1_ref, w2_ref, b2_ref, gate_ref, acc_ref, *, inv_hw):
    t = pl.program_id(1)

    @pl.when(t == 0)
    def _():
        acc_ref[...] = jnp.zeros_like(acc_ref)

    acc_ref[...] += jnp.sum(x_ref[0].astype(jnp.float32), axis=-1, keepdims=True)

    @pl.when(t == pl.num_programs(1) - 1)
    def _():
        pooled = acc_ref[...] * inv_hw                                         # (C, 1)
        h = jnp.sum(w1t_ref[...] * pooled, axis=0, keepdims=True) + b1_ref[...]
        h = h * jax.nn.sigmoid(h)
        g = jnp.sum(w2_ref[...] * h, axis=-1, keepdims=True) + b2_ref[...]
        gate_ref[0] = jax.nn.sigmoid(g)                                        # (C, 1)


def _se_apply_kernel(x_ref, gate_ref, o_ref):
    x = x_ref[0]                                                               # (C, tile)
    o_ref[0] = x * gate_ref[0].astype(x.dtype)


# --------------------------------------------------------------------------------------
# Wrapper
# --------------------------------------------------------------------------------------
def squeeze_excitation(x_nchw, w1, b1, w2, b2, *,
                       max_resident_bytes=48 * 1024 * 1024,   # fits v7x's 64 MiB VMEM
                       donate_input=False):
    """x_nchw: (N, C, H, W).  w1: (R, C), b1: (R,), w2: (C, R), b2: (C,)."""
    N, C, H, W = x_nchw.shape
    R = w1.shape[0]
    HW = H * W
    dtype = x_nchw.dtype
    isz = jnp.dtype(dtype).itemsize

    # Tiny f32 weights. w1 is stored transposed so both contractions are mul + reduce.
    w1t = jnp.asarray(w1, jnp.float32).T                      # (C, R)
    b1r = jnp.asarray(b1, jnp.float32).reshape(1, R)
    w2m = jnp.asarray(w2, jnp.float32).reshape(C, R)
    b2c = jnp.asarray(b2, jnp.float32).reshape(C, 1)
    inv_hw = 1.0 / float(HW)

    x_flat = x_nchw.reshape(N, C, HW)                         # free reshape (contiguous)

    weight_bytes = 4 * (2 * C * R + R + C)
    # Double-buffered x block + double-buffered out block + weights + slack.
    resident_need = 4 * C * HW * isz + weight_bytes + (1 << 20)
    alias = {0: 0} if donate_input else {}

    if resident_need <= max_resident_bytes:
        # ---------------- resident path ----------------
        # Block shape equals the full (C, HW) sample, so no (8,128) padding and no
        # wrapper-side pad/slice HBM round-trips are needed.
        vmem_limit = min(max(int(resident_need * 1.25), 8 << 20), 64 << 20)

        out_flat = pl.pallas_call(
            functools.partial(_se_resident_kernel, inv_hw=inv_hw),
            out_shape=jax.ShapeDtypeStruct((N, C, HW), dtype),
            grid_spec=pltpu.PrefetchScalarGridSpec(
                num_scalar_prefetch=0,
                grid=(N,),
                in_specs=[
                    pl.BlockSpec((1, C, HW), lambda n: (n, 0, 0)),    # x, one sample/step
                    pl.BlockSpec((C, R), lambda n: (0, 0)),           # w1^T (resident)
                    pl.BlockSpec((1, R), lambda n: (0, 0)),           # b1
                    pl.BlockSpec((C, R), lambda n: (0, 0)),           # w2
                    pl.BlockSpec((C, 1), lambda n: (0, 0)),           # b2
                ],
                out_specs=pl.BlockSpec((1, C, HW), lambda n: (n, 0, 0)),
            ),
            compiler_params=pltpu.CompilerParams(
                dimension_semantics=("parallel",),
                vmem_limit_bytes=vmem_limit,
            ),
            input_output_aliases=alias,
        )(x_flat, w1t, b1r, w2m, b2c)

        return out_flat.reshape(N, C, H, W)

    # ---------------- tiled two-sweep fallback ----------------
    # Biggest lane-dense spatial tile whose double-buffered in+out blocks fit the budget.
    hw_tile = max(_LANE, (max_resident_bytes // (5 * C * isz)) // _LANE * _LANE)
    hw_tile = min(hw_tile, _round_up(HW, _LANE))
    HWp = _round_up(HW, hw_tile)
    n_t = HWp // hw_tile
    if HWp != HW:
        # Zero-pad so every spatial tile is full; padded zeros don't skew the sum
        # (we divide by the true HW) and are sliced off at the end.
        x_flat = jnp.pad(x_flat, ((0, 0), (0, 0), (0, HWp - HW)))

    vmem_limit = min(max(int((5 * C * hw_tile * isz + weight_bytes) * 1.5), 8 << 20),
                     64 << 20)

    # Sweep 1: pooled sum + gate.
    gate = pl.pallas_call(
        functools.partial(_se_gate_kernel, inv_hw=inv_hw),
        out_shape=jax.ShapeDtypeStruct((N, C, 1), jnp.float32),
        grid_spec=pltpu.PrefetchScalarGridSpec(
            num_scalar_prefetch=0,
            grid=(N, n_t),
            in_specs=[
                pl.BlockSpec((1, C, hw_tile), lambda n, t: (n, 0, t)),
                pl.BlockSpec((C, R), lambda n, t: (0, 0)),
                pl.BlockSpec((1, R), lambda n, t: (0, 0)),
                pl.BlockSpec((C, R), lambda n, t: (0, 0)),
                pl.BlockSpec((C, 1), lambda n, t: (0, 0)),
            ],
            out_specs=pl.BlockSpec((1, C, 1), lambda n, t: (n, 0, 0)),
            scratch_shapes=[pltpu.VMEM((C, 1), jnp.float32)],
        ),
        compiler_params=pltpu.CompilerParams(
            dimension_semantics=("parallel", "arbitrary"),
            vmem_limit_bytes=vmem_limit,
        ),
    )(x_flat, w1t, b1r, w2m, b2c)

    # Sweep 2: apply gate. Both axes parallel -> both TensorCores busy on v7x.
    out_flat = pl.pallas_call(
        _se_apply_kernel,
        out_shape=jax.ShapeDtypeStruct((N, C, HWp), dtype),
        grid_spec=pltpu.PrefetchScalarGridSpec(
            num_scalar_prefetch=0,
            grid=(N, n_t),
            in_specs=[
                pl.BlockSpec((1, C, hw_tile), lambda n, t: (n, 0, t)),
                pl.BlockSpec((1, C, 1), lambda n, t: (n, 0, 0)),
            ],
            out_specs=pl.BlockSpec((1, C, hw_tile), lambda n, t: (n, 0, t)),
        ),
        compiler_params=pltpu.CompilerParams(
            dimension_semantics=("parallel", "parallel"),
            vmem_limit_bytes=vmem_limit,
        ),
        input_output_aliases=alias,
    )(x_flat, gate)

    if HWp != HW:
        out_flat = out_flat[:, :, :HW]
    return out_flat.reshape(N, C, H, W)


# --------------------------------------------------------------------------------------
# Pure-JAX reference mirroring the PyTorch SqueezeExcitation module (f32 math).
# --------------------------------------------------------------------------------------
def _reference(x, w1, b1, w2, b2):
    xf = x.astype(jnp.float32)
    pooled = jnp.mean(xf, axis=(2, 3))                       # (N, C)
    h = pooled @ w1.T + b1                                   # (N, R)
    h = h * jax.nn.sigmoid(h)                                # SiLU
    g = jax.nn.sigmoid(h @ w2.T + b2)                        # (N, C)
    return xf * g[:, :, None, None]


if __name__ == "__main__":
    key = jax.random.PRNGKey(0)
    kx, k1, kb1, k2, kb2 = jax.random.split(key, 5)

    # Shapes implied by the module: NCHW input; 1x1 convs C -> R -> C (R = C / 2).
    N, C, H, W = 2, 4, 16, 16
    R = 2

    x32 = jax.random.normal(kx, (N, C, H, W), dtype=jnp.float32)
    w1 = jax.random.normal(k1, (R, C), dtype=jnp.float32) * 0.5   # Conv2d(C, R, 1).weight
    b1 = jax.random.normal(kb1, (R,), dtype=jnp.float32) * 0.1
    w2 = jax.random.normal(k2, (C, R), dtype=jnp.float32) * 0.5   # Conv2d(R, C, 1).weight
    b2 = jax.random.normal(kb2, (C,), dtype=jnp.float32) * 0.1

    # 1) bf16 activation stream, whole-sample-resident path (the main fast path).
    xbf = x32.astype(jnp.bfloat16)
    out = jax.block_until_ready(squeeze_excitation(xbf, w1, b1, w2, b2))
    ref = _reference(xbf, w1, b1, w2, b2)
    assert out.shape == (N, C, H, W) and out.dtype == jnp.bfloat16
    err = jnp.max(jnp.abs(out.astype(jnp.float32) - ref))
    assert jnp.allclose(out.astype(jnp.float32), ref, atol=2e-2, rtol=2e-2), (
        f"bf16 resident path max abs err {err}")

    # 2) f32, forced tiled two-sweep fallback (the big-activation / small-VMEM path).
    out2 = jax.block_until_ready(
        squeeze_excitation(x32, w1, b1, w2, b2, max_resident_bytes=8 * 1024))
    ref2 = _reference(x32, w1, b1, w2, b2)
    assert jnp.allclose(out2, ref2, atol=1e-5, rtol=1e-5), (
        f"tiled path max abs err {jnp.max(jnp.abs(out2 - ref2))}")

    # 3) Spatial size not a multiple of 128 -> resident path with full-extent block
    #    (no wrapper pad/slice; sum * 1/HW pooling stays exact).
    x3 = jax.random.normal(kx, (N, C, 10, 10), dtype=jnp.float32)
    out3 = jax.block_until_ready(squeeze_excitation(x3, w1, b1, w2, b2))
    ref3 = _reference(x3, w1, b1, w2, b2)
    assert jnp.allclose(out3, ref3, atol=1e-5, rtol=1e-5), (
        f"non-128 path max abs err {jnp.max(jnp.abs(out3 - ref3))}")

    print("KERNEL_OK")
</pallas_src>

<mosaic_0001>
module attributes {stable_mosaic.version = 11 : i64} {
  func.func @_se_resident_kernel(%arg0: i32, %arg1: memref<1x4x256xbf16, #tpu.memory_space<vmem>>, %arg2: memref<4x2xf32, #tpu.memory_space<vmem>>, %arg3: memref<1x2xf32, #tpu.memory_space<vmem>>, %arg4: memref<4x2xf32, #tpu.memory_space<vmem>>, %arg5: memref<4x1xf32, #tpu.memory_space<vmem>>, %arg6: memref<1x4x256xbf16, #tpu.memory_space<vmem>>) attributes {dimension_semantics = [#tpu.dimension_semantics<parallel>], iteration_bounds = array<i64: 2>, scalar_prefetch = 0 : i64, scratch_operands = 0 : i64, tpu.core_type = #tpu.core_type<tc>, window_params = [{transform_indices = @transform_0, window_bounds = array<i64: 1, 4, 256>}, {pipeline_mode = #tpu.pipeline_mode<synchronous>, transform_indices = @transform_1, window_bounds = array<i64: 4, 2>}, {pipeline_mode = #tpu.pipeline_mode<synchronous>, transform_indices = @transform_2, window_bounds = array<i64: 1, 2>}, {pipeline_mode = #tpu.pipeline_mode<synchronous>, transform_indices = @transform_3, window_bounds = array<i64: 4, 2>}, {pipeline_mode = #tpu.pipeline_mode<synchronous>, transform_indices = @transform_4, window_bounds = array<i64: 4, 1>}, {transform_indices = @transform_5, window_bounds = array<i64: 1, 4, 256>}]} {
    %c0 = arith.constant 0 : index
    %c0_0 = arith.constant 0 : index
    %c0_1 = arith.constant 0 : index
    %0 = vector.load %arg1[%c0, %c0_0, %c0_1] : memref<1x4x256xbf16, #tpu.memory_space<vmem>>, vector<1x4x256xbf16>
    %1 = vector.shape_cast %0 : vector<1x4x256xbf16> to vector<4x256xbf16>
    %2 = arith.extf %1 : vector<4x256xbf16> to vector<4x256xf32>
    %cst = arith.constant dense<0.000000e+00> : vector<4xf32>
    %3 = vector.multi_reduction <add>, %2, %cst [1] : vector<4x256xf32> to vector<4xf32>
    %4 = vector.shape_cast %3 : vector<4xf32> to vector<4x1xf32>
    %cst_2 = arith.constant 3.906250e-03 : f32
    %5 = vector.broadcast %cst_2 : f32 to vector<4x1xf32>
    %6 = arith.mulf %4, %5 : vector<4x1xf32>
    %c0_3 = arith.constant 0 : index
    %c0_4 = arith.constant 0 : index
    %7 = vector.load %arg2[%c0_3, %c0_4] : memref<4x2xf32, #tpu.memory_space<vmem>>, vector<4x2xf32>
    %8 = vector.broadcast %6 : vector<4x1xf32> to vector<4x2xf32>
    %9 = arith.mulf %7, %8 : vector<4x2xf32>
    %cst_5 = arith.constant dense<0.000000e+00> : vector<2xf32>
    %10 = vector.multi_reduction <add>, %9, %cst_5 [0] : vector<4x2xf32> to vector<2xf32>
    %11 = vector.shape_cast %10 : vector<2xf32> to vector<1x2xf32>
    %c0_6 = arith.constant 0 : index
    %c0_7 = arith.constant 0 : index
    %12 = vector.load %arg3[%c0_6, %c0_7] : memref<1x2xf32, #tpu.memory_space<vmem>>, vector<1x2xf32>
    %13 = arith.addf %11, %12 : vector<1x2xf32>
    %14 = arith.negf %13 : vector<1x2xf32>
    %15 = math.exp %14 : vector<1x2xf32>
    %cst_8 = arith.constant 1.000000e+00 : f32
    %16 = vector.broadcast %cst_8 : f32 to vector<1x2xf32>
    %17 = arith.addf %16, %15 : vector<1x2xf32>
    %18 = arith.divf %16, %17 : vector<1x2xf32>
    %19 = arith.mulf %13, %18 : vector<1x2xf32>
    %c0_9 = arith.constant 0 : index
    %c0_10 = arith.constant 0 : index
    %20 = vector.load %arg4[%c0_9, %c0_10] : memref<4x2xf32, #tpu.memory_space<vmem>>, vector<4x2xf32>
    %21 = vector.broadcast %19 : vector<1x2xf32> to vector<4x2xf32>
    %22 = arith.mulf %20, %21 : vector<4x2xf32>
    %cst_11 = arith.constant dense<0.000000e+00> : vector<4xf32>
    %23 = vector.multi_reduction <add>, %22, %cst_11 [1] : vector<4x2xf32> to vector<4xf32>
    %24 = vector.shape_cast %23 : vector<4xf32> to vector<4x1xf32>
    %c0_12 = arith.constant 0 : index
    %c0_13 = arith.constant 0 : index
    %25 = vector.load %arg5[%c0_12, %c0_13] : memref<4x1xf32, #tpu.memory_space<vmem>>, vector<4x1xf32>
    %26 = arith.addf %24, %25 : vector<4x1xf32>
    %27 = arith.negf %26 : vector<4x1xf32>
    %28 = math.exp %27 : vector<4x1xf32>
    %cst_14 = arith.constant 1.000000e+00 : f32
    %29 = vector.broadcast %cst_14 : f32 to vector<4x1xf32>
    %30 = arith.addf %29, %28 : vector<4x1xf32>
    %31 = arith.divf %29, %30 : vector<4x1xf32>
    %32 = arith.truncf %31 : vector<4x1xf32> to vector<4x1xbf16>
    %33 = vector.broadcast %32 : vector<4x1xbf16> to vector<4x256xbf16>
    %34 = arith.mulf %1, %33 : vector<4x256xbf16>
    %c0_15 = arith.constant 0 : index
    %c0_16 = arith.constant 0 : index
    %c0_17 = arith.constant 0 : index
    %35 = vector.load %arg6[%c0_15, %c0_16, %c0_17] : memref<1x4x256xbf16, #tpu.memory_space<vmem>>, vector<1x4x256xbf16>
    %36 = vector.shape_cast %35 : vector<1x4x256xbf16> to vector<4x256xbf16>
    %37 = vector.shape_cast %34 : vector<4x256xbf16> to vector<1x4x256xbf16>
    tpu.vector_store %arg6[%c0_15, %c0_16, %c0_17], %37 {strides = array<i32>} : memref<1x4x256xbf16, #tpu.memory_space<vmem>>, vector<1x4x256xbf16>,
    return
  }
  func.func @transform_0(%arg0: i32) -> (i32, i32, i32) {
    %c0_i32 = arith.constant 0 : i32
    %c0_i32_0 = arith.constant 0 : i32
    %c0_i32_1 = arith.constant 0 : i32
    return %arg0, %c0_i32, %c0_i32_0 : i32, i32, i32
  }
  func.func @transform_1(%arg0: i32) -> (i32, i32) {
    %c0_i32 = arith.constant 0 : i32
    %c0_i32_0 = arith.constant 0 : i32
    %c0_i32_1 = arith.constant 0 : i32
    return %c0_i32, %c0_i32_0 : i32, i32
  }
  func.func @transform_2(%arg0: i32) -> (i32, i32) {
    %c0_i32 = arith.constant 0 : i32
    %c0_i32_0 = arith.constant 0 : i32
    %c0_i32_1 = arith.constant 0 : i32
    return %c0_i32, %c0_i32_0 : i32, i32
  }
  func.func @transform_3(%arg0: i32) -> (i32, i32) {
    %c0_i32 = arith.constant 0 : i32
    %c0_i32_0 = arith.constant 0 : i32
    %c0_i32_1 = arith.constant 0 : i32
    return %c0_i32, %c0_i32_0 : i32, i32
  }
  func.func @transform_4(%arg0: i32) -> (i32, i32) {
    %c0_i32 = arith.constant 0 : i32
    %c0_i32_0 = arith.constant 0 : i32
    %c0_i32_1 = arith.constant 0 : i32
    return %c0_i32, %c0_i32_0 : i32, i32
  }
  func.func @transform_5(%arg0: i32) -> (i32, i32, i32) {
    %c0_i32 = arith.constant 0 : i32
    %c0_i32_0 = arith.constant 0 : i32
    %c0_i32_1 = arith.constant 0 : i32
    return %arg0, %c0_i32, %c0_i32_0 : i32, i32, i32
  }
}

</mosaic_0001>

<llo_original>
// kernel: tpu_custom_call.1
$region0: #{tpu_custom_call.1}
  #allocation0 [shape = 'u32[]', space=smem, size = 0x4, offset = 0x4, fixed_abs, tag = 'smem constant byte address 0x4 - core index']
  #allocation1 [shape = 'u32[144,128]{1,0:T(1,128)}', space=vmem, size = 0x12000, scoped, tag = 'internal scratch']
  %s0 = inlined_call_operand.vmem [shape: bf16[2,4,256], index: 0, kind: input, shape index: {}]
  %s1 = inlined_call_operand.vmem [shape: f32[4,2], index: 1, kind: input, shape index: {}]
  %s2 = inlined_call_operand.vmem [shape: f32[1,2], index: 2, kind: input, shape index: {}]
  %s3 = inlined_call_operand.vmem [shape: f32[4,2], index: 3, kind: input, shape index: {}]
  %s4 = inlined_call_operand.vmem [shape: f32[4,1], index: 4, kind: input, shape index: {}]
  %s5 = inlined_call_operand.hbm [shape: bf16[2,4,256], index: 5, kind: output, shape index: {}]
  %s6 = sld [smem:[#allocation0]]
  $region53: #{tpu_custom_call.1} parent=0
    _
  %s8 = ssub.s32 1, %s6
  %s9 = scalar_select 0, %s8, %s6
  $region1: #{tpu_custom_call.1} parent=0
    #allocation2 [shape = 'u8[4096]{0}', space=vmem, size = 0x1000, scoped, tag = 'output window, operand 0']
    #allocation3 [shape = 's32[2]{0}', space=sflag, size = 0x8, scoped, tag = 'scoped memory for tpu_custom_call.1']
    %10 = vsyncpa [#allocation3], 0
    %s11 = scalar_lea.sflag [#allocation3], 1
    %12 = vsyncpa %s11, 0
    loop: start=0, step=1, limit=4
    $region2: #{tpu_custom_call.1} parent=1 // loop_pre_header
      _
    $region3: #{tpu_custom_call.1} parent=1 // loop_header
      %s14 = sphi 0, %s18
      %p15 = scmp.ge.s32.totalorder %s14, 4
      %s24 = sphi 0, %s26
      %s27 = sphi 0, %s24
      %s28 = sphi 0, %s27
      %s44 = sphi 0, %s28
      %s48 = sphi 0, %s48
      %s50 = sphi 0, %s48
      %s51 = sphi 0, %s50
      %s65 = sphi 0, %s51
      %s69 = sphi 0, %s69
      %s71 = sphi 0, %s69
      %s72 = sphi 0, %s71
      %s86 = sphi 0, %s72
      %s90 = sphi 0, %s90
      %s92 = sphi 0, %s90
      %s93 = sphi 0, %s92
      %s107 = sphi 0, %s93
      %s111 = sphi 0, %s111
      %s113 = sphi 0, %s111
      %s114 = sphi 0, %s113
      %s128 = sphi 0, %s114
      %s134 = sphi 0, %s136
      %s137 = sphi 0, %s134
      %s138 = sphi 0, %s137
      %s154 = sphi 0, %s138
    $region4: #{tpu_custom_call.1} parent=1 // loop_header_branch
      %17 = sbr.rel (%p15) target = $region8
    $region5: #{tpu_custom_call.1} parent=1 // loop_body
      %s19 = ssub.s32 %s14, 1
      %s20 = ssub.s32 %s14, 2
      %s21 = sadd.s32 %s14, 1
      %s22 = ssub.s32 %s14, %s21
      %p23 = scmp.eq.s32.totalorder %s22, 0
      %s25 = sadd.s32 %s24, 1
      %s26 = scalar_select %p23, %s24, %s25
      %p29 = pneg %p23
      %p30 = scmp.eq.s32.totalorder %s14, 1
      %p31 = por %p29, %p30
      %p32 = scmp.ne.s32.totalorder %s24, %s27
      %p33 = scmp.eq.s32.totalorder %s14, 0
      %p34 = por %p32, %p33
      %p35 = scmp.ne.s32.totalorder %s24, %s27
      %p36 = scmp.eq.s32.totalorder %s19, 1
      %p37 = por %p35, %p36
      %p38 = scmp.ne.s32.totalorder %s27, %s28
      %p39 = scmp.eq.s32.totalorder %s19, 0
      %p40 = por %p38, %p39
      %p41 = scmp.ne.s32.totalorder %s27, %s28
      %p42 = scmp.eq.s32.totalorder %s20, 1
      %p43 = por %p41, %p42
      %p45 = scmp.ne.s32.totalorder %s28, %s44
      %p46 = scmp.eq.s32.totalorder %s20, 0
      %p47 = por %p45, %p46
      %s49 = sadd.s32 %s48, 1
      %p52 = scmp.eq.s32.totalorder %s14, 1
      %p53 = scmp.ne.s32.totalorder %s48, %s50
      %p54 = scmp.eq.s32.totalorder %s14, 0
      %p55 = por %p53, %p54
      %p56 = scmp.ne.s32.totalorder %s48, %s50
      %p57 = scmp.eq.s32.totalorder %s19, 1
      %p58 = por %p56, %p57
      %p59 = scmp.ne.s32.totalorder %s50, %s51
      %p60 = scmp.eq.s32.totalorder %s19, 0
      %p61 = por %p59, %p60
      %p62 = scmp.ne.s32.totalorder %s50, %s51
      %p63 = scmp.eq.s32.totalorder %s20, 1
      %p64 = por %p62, %p63
      %p66 = scmp.ne.s32.totalorder %s51, %s65
      %p67 = scmp.eq.s32.totalorder %s20, 0
      %p68 = por %p66, %p67
      %s70 = sadd.s32 %s69, 1
      %p73 = scmp.eq.s32.totalorder %s14, 1
      %p74 = scmp.ne.s32.totalorder %s69, %s71
      %p75 = scmp.eq.s32.totalorder %s14, 0
      %p76 = por %p74, %p75
      %p77 = scmp.ne.s32.totalorder %s69, %s71
      %p78 = scmp.eq.s32.totalorder %s19, 1
      %p79 = por %p77, %p78
      %p80 = scmp.ne.s32.totalorder %s71, %s72
      %p81 = scmp.eq.s32.totalorder %s19, 0
      %p82 = por %p80, %p81
      %p83 = scmp.ne.s32.totalorder %s71, %s72
      %p84 = scmp.eq.s32.totalorder %s20, 1
      %p85 = por %p83, %p84
      %p87 = scmp.ne.s32.totalorder %s72, %s86
      %p88 = scmp.eq.s32.totalorder %s20, 0
      %p89 = por %p87, %p88
      %s91 = sadd.s32 %s90, 1
      %p94 = scmp.eq.s32.totalorder %s14, 1
      %p95 = scmp.ne.s32.totalorder %s90, %s92
      %p96 = scmp.eq.s32.totalorder %s14, 0
      %p97 = por %p95, %p96
      %p98 = scmp.ne.s32.totalorder %s90, %s92
      %p99 = scmp.eq.s32.totalorder %s19, 1
      %p100 = por %p98, %p99
      %p101 = scmp.ne.s32.totalorder %s92, %s93
      %p102 = scmp.eq.s32.totalorder %s19, 0
      %p103 = por %p101, %p102
      %p104 = scmp.ne.s32.totalorder %s92, %s93
      %p105 = scmp.eq.s32.totalorder %s20, 1
      %p106 = por %p104, %p105
      %p108 = scmp.ne.s32.totalorder %s93, %s107
      %p109 = scmp.eq.s32.totalorder %s20, 0
      %p110 = por %p108, %p109
      %s112 = sadd.s32 %s111, 1
      %p115 = scmp.eq.s32.totalorder %s14, 1
      %p116 = scmp.ne.s32.totalorder %s111, %s113
      %p117 = scmp.eq.s32.totalorder %s14, 0
      %p118 = por %p116, %p117
      %p119 = scmp.ne.s32.totalorder %s111, %s113
      %p120 = scmp.eq.s32.totalorder %s19, 1
      %p121 = por %p119, %p120
      %p122 = scmp.ne.s32.totalorder %s113, %s114
      %p123 = scmp.eq.s32.totalorder %s19, 0
      %p124 = por %p122, %p123
      %p125 = scmp.ne.s32.totalorder %s113, %s114
      %p126 = scmp.eq.s32.totalorder %s20, 1
      %p127 = por %p125, %p126
      %p129 = scmp.ne.s32.totalorder %s114, %s128
      %p130 = scmp.eq.s32.totalorder %s20, 0
      %p131 = por %p129, %p130
      %s132 = ssub.s32 %s14, %s21
      %p133 = scmp.eq.s32.totalorder %s132, 0
      %s135 = sadd.s32 %s134, 1
      %s136 = scalar_select %p133, %s134, %s135
      %p139 = pneg %p133
      %p140 = scmp.eq.s32.totalorder %s14, 1
      %p141 = por %p139, %p140
      %p142 = scmp.ne.s32.totalorder %s134, %s137
      %p143 = scmp.eq.s32.totalorder %s14, 0
      %p144 = por %p142, %p143
      %p145 = scmp.ne.s32.totalorder %s134, %s137
      %p146 = scmp.eq.s32.totalorder %s19, 1
      %p147 = por %p145, %p146
      %p148 = scmp.ne.s32.totalorder %s137, %s138
      %p149 = scmp.eq.s32.totalorder %s19, 0
      %p150 = por %p148, %p149
      %p151 = scmp.ne.s32.totalorder %s137, %s138
      %p152 = scmp.eq.s32.totalorder %s20, 1
      %p153 = por %p151, %p152
      %p155 = scmp.ne.s32.totalorder %s138, %s154
      %p156 = scmp.eq.s32.totalorder %s20, 0
      %p157 = por %p155, %p156
      %p158 = scmp.le.s32.totalorder 1, %s14
      %p159 = scmp.lt.s32.totalorder %s14, 3
      %p160 = pnand %p158, %p159
      %p161 = pneg %p160
      // Predicated region
      $region9: #{tpu_custom_call.1} parent=5 // pred_check
        _
      $region10: #{tpu_custom_call.1} parent=5 // pred_check_branch
        %163 = sbr.rel (%p160) target = $region12
      $region11: #{tpu_custom_call.1} parent=5 // pred_region
        %s164 = ssub.s32 %s14, 1
        // Predicated region
        $region13: #{tpu_custom_call.1} parent=11 // pred_check
          %p165 = pneg %p61
        $region14: #{tpu_custom_call.1} parent=11 // pred_check_branch
          %167 = sbr.rel (%p165) target = $region16
        $region15: #{tpu_custom_call.1} parent=11 // pred_region
          _
        $region16: #{tpu_custom_call.1} parent=11 // pred_fallthru
          _
        // Predicated region
        $region17: #{tpu_custom_call.1} parent=11 // pred_check
          %p168 = pneg %p82
        $region18: #{tpu_custom_call.1} parent=11 // pred_check_branch
          %170 = sbr.rel (%p168) target = $region20
        $region19: #{tpu_custom_call.1} parent=11 // pred_region
          _
        $region20: #{tpu_custom_call.1} parent=11 // pred_fallthru
          _
        // Predicated region
        $region21: #{tpu_custom_call.1} parent=11 // pred_check
          %p171 = pneg %p103
        $region22: #{tpu_custom_call.1} parent=11 // pred_check_branch
          %173 = sbr.rel (%p171) target = $region24
        $region23: #{tpu_custom_call.1} parent=11 // pred_region
          _
        $region24: #{tpu_custom_call.1} parent=11 // pred_fallthru
          _
        // Predicated region
        $region25: #{tpu_custom_call.1} parent=11 // pred_check
          %p174 = pneg %p124
        $region26: #{tpu_custom_call.1} parent=11 // pred_check_branch
          %176 = sbr.rel (%p174) target = $region28
        $region27: #{tpu_custom_call.1} parent=11 // pred_region
          _
        $region28: #{tpu_custom_call.1} parent=11 // pred_fallthru
          _
      $region12: #{tpu_custom_call.1} parent=5 // pred_fallthru
        _
      %p177 = scmp.lt.s32.totalorder %s14, 2
      // Predicated region
      $region29: #{tpu_custom_call.1} parent=5 // pred_check
        %p178 = pneg %p177
      $region30: #{tpu_custom_call.1} parent=5 // pred_check_branch
        %180 = sbr.rel (%p178) target = $region32
      $region31: #{tpu_custom_call.1} parent=5 // pred_region
        // Predicated region
        $region33: #{tpu_custom_call.1} parent=31 // pred_check
          %p181 = pneg %p34
        $region34: #{tpu_custom_call.1} parent=31 // pred_check_branch
          %183 = sbr.rel (%p181) target = $region36
        $region35: #{tpu_custom_call.1} parent=31 // pred_region
          %p184 = scmp.lt.s32.totalorder %s14, 1
          %s185 = scalar_select %p184, %s14, 1
          %s186 = smul.addr %s185, 2
          %s187 = smul.addr %s186, 2
          %s188 = scalar_lea.vmem %s0, %s187
        $region36: #{tpu_custom_call.1} parent=31 // pred_fallthru
          _
      $region32: #{tpu_custom_call.1} parent=5 // pred_fallthru
        _
      %p189 = scmp.le.s32.totalorder 1, %s14
      %p190 = scmp.lt.s32.totalorder %s14, 3
      %p191 = pnand %p189, %p190
      %p192 = pneg %p191
      // Predicated region
      $region37: #{tpu_custom_call.1} parent=5 // pred_check
        _
      $region38: #{tpu_custom_call.1} parent=5 // pred_check_branch
        %194 = sbr.rel (%p191) target = $region40
      $region39: #{tpu_custom_call.1} parent=5 // pred_region
        %s195 = ssub.s32 %s14, 1
        %p196 = scmp.lt.s32.totalorder %s19, 1
        %s197 = scalar_select %p196, %s19, 1
        %s198 = smul.addr %s197, 2
        %s199 = smul.addr %s198, 2
        %s200 = scalar_lea.vmem %s0, %s199
        %p201 = pneg %p40
        %p202 = pneg %p37
        %p203 = pneg %p61
        %p204 = pneg %p58
        %p205 = pneg %p82
        %p206 = pneg %p79
        %p207 = pneg %p103
        %p208 = pneg %p100
        %p209 = pneg %p124
        %p210 = pneg %p121
        %p211 = pneg %p150
        %p212 = pneg %p147
        %s213 = sand.u32 %s137, 1
        %s214 = scalar_lea.sflag [#allocation3], %s213
        %s215 = sand.u32 %s137, 1
        %s216 = smul.addr %s215, 4
        %s217 = scalar_lea.vmem [#allocation2], %s216
        %p218 = scmp.lt.s32.totalorder %s19, 1
        %s219 = scalar_select %p218, %s19, 1
        %s220 = smul.addr %s219, 2
        %s221 = smul.addr %s220, 2
        %s222 = scalar_lea.vmem %s0, %s221
        %v223 = vld [vmem:[%s222] sm:$0xf]
        %v224 = vunpack.c.l.bf16 %v223
        %v226 = vcombine.high %v224, %v224
        %vm228 = vcmask 1043456
        %v229 = vsel %vm228, %v224, 0.0
        %v230 = vsel %vm228, %v226, 0.0
        %v231 = vadd.f32 %v229, %v230
        %232 = vadd.xlane.f32.xlu0 %v231
        %v233 = vpop.xlane.xlu0 %232
        %v234 = vmul.f32 %v233, 0.00390625
        %v235 = vld [vmem:[%s1] sm:$0xf]
        %v236 = vmul.f32 %v235, %v234
        %vm237 = vcmask 11264
        %v238 = vsel %vm237, %v236, 0.0
        %v239 = vrot.slane %v238, 4
        %v240 = vadd.f32 %v238, %v239
        %v241 = vrot.slane %v240, 2
        %v242 = vadd.f32 %v240, %v241
        %v243 = vrot.slane %v242, 1
        %v244 = vadd.f32 %v242, %v243
        %v245 = vld [vmem:[%s2] sm:$0x1]
        %v246 = vadd.f32 %v244, %v245
        %v247 = vxor.u32 %v246, 2147483648
        %v248 = vmul.f32 %v247, 1.442695
        %v249 = vpow.pop %v248
        %v250 = vadd.f32 %v249, 1.0
        %v251 = vrcp.pop %v250
        %v252 = vmul.f32 1.0, %v251
        %v253 = vmul.f32 %v246, %v252
        %v254 = vld [vmem:[%s3] sm:$0xf]
        %v255 = vlaneseq
        %v256 = vshrl.u32 %v255, 7
        %v257 = vsub.s32 0, %v256
        %v258 = vrot.slane %v253, %v257
        %v259 = vmul.f32 %v254, %v258
        %v260 = vsel %vm237, %v259, 0.0
        %261 = vadd.xlane.f32.xlu0 %v260
        %v262 = vpop.xlane.xlu0 %261
        %v263 = vld [vmem:[%s4] sm:$0xf]
        %v264 = vadd.f32 %v262, %v263
        %v265 = vxor.u32 %v264, 2147483648
        %v266 = vmul.f32 %v265, 1.442695
        %v267 = vpow.pop %v266
        %v268 = vadd.f32 %v267, 1.0
        %v269 = vrcp.pop %v268
        %v270 = vmul.f32 1.0, %v269
        %v271 = vpack.c.bf16 %v270, %v270
        %273 = vset.pattern.permute.xlu0 0
        %274 = vperm.xlu0 %273, %v271
        %v275 = vpop.permute.xlu0 %274
        %v278 = vunpack.c.l.s4 269488144
        %v279 = vunpack.c.0.s8 %v278
        %v280 = vlaneseq
        %v281 = vshrl.u32 %v280, 7
        %v282 = vsub.s32 %v279, %v281
        %v283 = vrot.slane %v275, %v282
        %v285 = vmul.bf16 %v223, %v283
        %286 = vst [vmem:[%s217] sm:$0xf] %v285
        %s287 = sand.u32 %s137, 1
        %s288 = scalar_lea.sflag [#allocation3], %s287
        %s289 = sand.u32 %s137, 1
        %s290 = smul.addr %s289, 4
        %s291 = scalar_lea.vmem [#allocation2], %s290
        // Predicated region
        $region41: #{tpu_custom_call.1} parent=39 // pred_check
          %p292 = pneg %p147
        $region42: #{tpu_custom_call.1} parent=39 // pred_check_branch
          %294 = sbr.rel (%p292) target = $region44
        $region43: #{tpu_custom_call.1} parent=39 // pred_region
          %s296 = ssub.s32 64, 64
          %297 = vsyncadd %s288, %s296
          %s298 = smul.addr %s19, 2
          %s299 = smul.addr %s298, 32
          %s300 = scalar_lea.hbm %s5, %s299
          %s302 = sshll.u32 %s291, 4
          %s303 = int_to_ptr.vmem [resolvable:$true] %s302
          %305 = dma.vmem_to_hbm [thread:$0]  %s303, 64, %s300, %s288
        $region44: #{tpu_custom_call.1} parent=39 // pred_fallthru
          _
      $region40: #{tpu_custom_call.1} parent=5 // pred_fallthru
        _
      %p306 = scmp.le.s32.totalorder 2, %s14
      // Predicated region
      $region45: #{tpu_custom_call.1} parent=5 // pred_check
        %p307 = pneg %p306
      $region46: #{tpu_custom_call.1} parent=5 // pred_check_branch
        %309 = sbr.rel (%p307) target = $region48
      $region47: #{tpu_custom_call.1} parent=5 // pred_region
        %s310 = ssub.s32 %s14, 2
        // Predicated region
        $region49: #{tpu_custom_call.1} parent=47 // pred_check
          %p311 = pneg %p153
        $region50: #{tpu_custom_call.1} parent=47 // pred_check_branch
          %313 = sbr.rel (%p311) target = $region52
        $region51: #{tpu_custom_call.1} parent=47 // pred_region
          %s314 = sand.u32 %s138, 1
          %s315 = scalar_lea.sflag [#allocation3], %s314
          %s316 = sand.u32 %s138, 1
          %s317 = smul.addr %s316, 4
          %s318 = scalar_lea.vmem [#allocation2], %s317
          %319 = dma.done %s315, 64
        $region52: #{tpu_custom_call.1} parent=47 // pred_fallthru
          _
      $region48: #{tpu_custom_call.1} parent=5 // pred_fallthru
        _
    $region6: #{tpu_custom_call.1} parent=1 // loop_footer
      %s18 = sadd.s32 1, %s14
    $region7: #{tpu_custom_call.1} parent=1 // loop_footer_branch
      %13 = sbr.rel target = $region3
    $region8: #{tpu_custom_call.1} parent=1 // loop_exit
      _
    %320 = vsyncpa [#allocation3], 1
    %s321 = scalar_lea.sflag [#allocation3], 1
    %322 = vsyncpa %s321, 1

</llo_original>
